<compile_context>
chip_gen: v7x
topology: tpu7x:2x2x1
jax: 0.10.0
libtpu: 0.0.40
codegen_flags: <defaults>
</compile_context>

<pallas_src>
import jax
import jax.numpy as jnp
from jax.experimental import pallas as pl
from jax.experimental.pallas import tpu as pltpu

_N_BIAS_ROWS = 8  # ones-block rows appended to 'stacked' (sublane aligned)


def _rows_per_block(N, C, HW, itemsize=4, target_bytes=512 * 1024):
    """Packed rows (= images*channels) per grid block.

    Whole images only (multiple of C), as many images as fit a ~0.5 MiB x
    block (the stacked 9-tap operand built in-kernel is ~10x that, still
    comfortably inside the 32 MiB default scoped VMEM on v7x), and a divisor
    of N so the grid tiles evenly.
    """
    max_rows = max(C, target_bytes // max(1, HW * itemsize))
    imgs = max(1, min(N, max_rows // C))
    while N % imgs:
        imgs -= 1
    return imgs * C


def _make_score_prior_kernel(H, W, RB):
    HW = H * W
    # tap t = dy*3 + dx  ->  flattened spatial shift s = (dy-1)*W + (dx-1)
    shifts = [(dy - 1) * W + (dx - 1) for dy in range(3) for dx in range(3)]

    def kernel(x_ref, w_ref, m_ref, s_ref, o_ref):
        # x_ref: (RB, HW)            packed (image, channel) rows, HW on lanes
        # w_ref: (RB, 9*RB + 8)      block-diag conv weights + bias columns (resident)
        # m_ref: (9, HW)             per-tap 'same'-padding validity masks (resident)
        # s_ref: (1, 1) SMEM         1 / sigma^2
        # o_ref: (RB, HW)
        x = x_ref[...]
        masks = m_ref[...]

        # Build the stacked tap operand: 9 spatially shifted + masked copies of
        # the packed block, plus a constant ones-block that carries the bias.
        # Rolls act along the lane (HW) axis only, so rows (one spatial plane
        # per image-channel) never mix; wrap-around pixels are exactly the
        # masked ones.
        parts = []
        for t, s in enumerate(shifts):
            if s == 0:
                parts.append(x)                                  # center tap, mask == 1
            else:
                shifted = pltpu.roll(x, (-s) % HW, axis=1)       # shifted[hw] = x[hw + s]
                parts.append(shifted * masks[t:t + 1, :])        # zero out-of-image sources
        parts.append(jnp.ones((_N_BIAS_ROWS, HW), x.dtype))      # bias carrier
        stacked = jnp.concatenate(parts, axis=0)                 # (9*RB + 8, HW)

        # One MXU matmul does the whole 9-tap / cross-channel contraction
        # (f32 accumulation); no serial VALU FMA chain remains.
        den = jnp.dot(w_ref[...], stacked,
                      preferred_element_type=jnp.float32)        # (RB, HW)

        inv_s2 = s_ref[0, 0]
        o_ref[...] = ((x - den) * inv_s2).astype(o_ref.dtype)    # Tweedie residual / sigma^2

    return kernel


def score_prior_forward(x_nchw, sigma, weight, bias):
    """ScorePrior.forward(x, sigma) with a synthetic 3x3-conv denoiser.

    x_nchw: (N, C, H, W) float32
    sigma : python float or 0-d array
    weight: (3, 3, C, C) float32  (ky, kx, Cin, Cout)
    bias  : (C,) float32
    """
    N, C, H, W = x_nchw.shape
    HW = H * W
    R = N * C
    x_packed = x_nchw.reshape(R, HW)                 # free reshape, rows = (image, channel)

    RB = _rows_per_block(N, C, HW)                   # rows per block (multiple of C)
    B = RB // C                                      # images per block
    nblk = R // RB

    # ---- hoisted, grid-invariant operands (computed once, resident in VMEM) ----

    # Per-tap validity masks for in-kernel 'same' zero padding.
    hw = jnp.arange(HW, dtype=jnp.int32)
    h = hw // W
    w = hw % W
    mask_rows = []
    for dy in range(3):
        for dx in range(3):
            sy, sx = dy - 1, dx - 1
            ok = jnp.ones((HW,), jnp.bool_)
            if sy == -1:
                ok = ok & (h >= 1)
            elif sy == 1:
                ok = ok & (h <= H - 2)
            if sx == -1:
                ok = ok & (w >= 1)
            elif sx == 1:
                ok = ok & (w <= W - 2)
            mask_rows.append(ok)
    masks = jnp.stack(mask_rows, axis=0).astype(jnp.float32)     # (9, HW)

    # Block-diagonal (per image) weight matrix mapping the stacked tap copies
    # of a row-block to its denoised rows.  Column layout matches 'stacked':
    # col = t*RB + b*C + ci ; row = a*C + co ; value = weight[t, ci, co] iff a == b.
    w9 = weight.astype(jnp.float32).reshape(9, C, C)             # [tap, cin, cout]
    eyeB = jnp.eye(B, dtype=jnp.float32)
    W_all = jnp.einsum("ab,tio->aotbi", eyeB, w9).reshape(RB, 9 * RB)
    # Bias folded in: extra columns multiplying the constant ones-block.
    bias_cols = jnp.zeros((RB, _N_BIAS_ROWS), jnp.float32).at[:, 0].set(
        jnp.tile(bias.astype(jnp.float32), B))
    W_aug = jnp.concatenate([W_all, bias_cols], axis=1)          # (RB, 9*RB + 8)

    inv_s2 = (1.0 / (jnp.asarray(sigma, jnp.float32) ** 2)).reshape(1, 1)

    out_packed = pl.pallas_call(
        _make_score_prior_kernel(H, W, RB),
        out_shape=jax.ShapeDtypeStruct((R, HW), x_nchw.dtype),
        grid=(nblk,),
        in_specs=[
            pl.BlockSpec((RB, HW), lambda i: (i, 0)),                    # packed x
            pl.BlockSpec((RB, 9 * RB + _N_BIAS_ROWS), lambda i: (0, 0)), # weights+bias (resident)
            pl.BlockSpec((9, HW), lambda i: (0, 0)),                     # tap masks (resident)
            pl.BlockSpec(memory_space=pltpu.MemorySpace.SMEM),           # 1/sigma^2 scalar
        ],
        out_specs=pl.BlockSpec((RB, HW), lambda i: (i, 0)),
        compiler_params=pltpu.CompilerParams(
            dimension_semantics=("parallel",),       # both TCs on v7x when nblk >= 2
        ),
    )(x_packed, W_aug, masks, inv_s2)

    return out_packed.reshape(N, C, H, W)


def _reference(x, sigma, weight, bias):
    """Pure-JAX reference (explicit pad + shifted slices) for correctness."""
    N, C, H, W = x.shape
    xpad = jnp.pad(x.astype(jnp.float32), ((0, 0), (0, 0), (1, 1), (1, 1)))
    den = jnp.zeros((N, C, H, W), jnp.float32)
    for dy in range(3):
        for dx in range(3):
            den = den + jnp.einsum(
                "nihw,io->nohw", xpad[:, :, dy:dy + H, dx:dx + W], weight[dy, dx]
            )
    den = den + bias[None, :, None, None]
    return (x.astype(jnp.float32) - den) / (sigma ** 2)


if __name__ == "__main__":
    # Small shapes consistent with an image prior: batch=2, channels=4, 16x16.
    N, C, H, W = 2, 4, 16, 16
    key = jax.random.PRNGKey(0)
    kx, kw, kb = jax.random.split(key, 3)

    x = jax.random.normal(kx, (N, C, H, W), dtype=jnp.float32)
    # Deterministic synthetic denoiser parameters (3x3 conv, C->C).
    weight = 0.05 * jax.random.normal(kw, (3, 3, C, C), dtype=jnp.float32)
    bias = 0.01 * jax.random.normal(kb, (C,), dtype=jnp.float32)
    # Keep test data exactly bf16-representable so the MXU contraction matches
    # the f32 reference bit-closely regardless of the f32-matmul pass count.
    x = x.astype(jnp.bfloat16).astype(jnp.float32)
    weight = weight.astype(jnp.bfloat16).astype(jnp.float32)
    bias = bias.astype(jnp.bfloat16).astype(jnp.float32)
    sigma = 0.1

    out = score_prior_forward(x, sigma, weight, bias)
    out = jax.block_until_ready(out)

    ref = _reference(x, sigma, weight, bias)
    assert out.shape == (N, C, H, W)
    assert jnp.allclose(out, ref, atol=2e-3, rtol=2e-3), "mismatch vs reference"

    print("KERNEL_OK")
</pallas_src>

<mosaic_0001>
module attributes {stable_mosaic.version = 11 : i64} {
  func.func @kernel(%arg0: i32, %arg1: memref<8x256xf32, #tpu.memory_space<vmem>>, %arg2: memref<8x80xf32, #tpu.memory_space<vmem>>, %arg3: memref<9x256xf32, #tpu.memory_space<vmem>>, %arg4: memref<1x1xf32, #tpu.memory_space<smem>>, %arg5: memref<8x256xf32, #tpu.memory_space<vmem>>) attributes {dimension_semantics = [#tpu.dimension_semantics<parallel>], iteration_bounds = array<i64: 1>, scalar_prefetch = 0 : i64, scratch_operands = 0 : i64, tpu.core_type = #tpu.core_type<tc>, window_params = [{transform_indices = @transform_0, window_bounds = array<i64: 8, 256>}, {pipeline_mode = #tpu.pipeline_mode<synchronous>, transform_indices = @transform_1, window_bounds = array<i64: 8, 80>}, {pipeline_mode = #tpu.pipeline_mode<synchronous>, transform_indices = @transform_2, window_bounds = array<i64: 9, 256>}, {transform_indices = @transform_3, window_bounds = array<i64: 1, 1>}, {transform_indices = @transform_4, window_bounds = array<i64: 8, 256>}]} {
    %c0 = arith.constant 0 : index
    %c0_0 = arith.constant 0 : index
    %0 = vector.load %arg1[%c0, %c0_0] : memref<8x256xf32, #tpu.memory_space<vmem>>, vector<8x256xf32>
    %c0_1 = arith.constant 0 : index
    %c0_2 = arith.constant 0 : index
    %1 = vector.load %arg3[%c0_1, %c0_2] : memref<9x256xf32, #tpu.memory_space<vmem>>, vector<9x256xf32>
    %c17_i32 = arith.constant 17 : i32
    %2 = tpu.dynamic_rotate %0 by %c17_i32 dim 1 : vector<8x256xf32>, i32 -> vector<8x256xf32>
    %3 = vector.extract_strided_slice %1 {offsets = [0, 0], sizes = [1, 256], strides = [1, 1]} : vector<9x256xf32> to vector<1x256xf32>
    %4 = vector.broadcast %3 : vector<1x256xf32> to vector<8x256xf32>
    %5 = arith.mulf %2, %4 : vector<8x256xf32>
    %c16_i32 = arith.constant 16 : i32
    %6 = tpu.dynamic_rotate %0 by %c16_i32 dim 1 : vector<8x256xf32>, i32 -> vector<8x256xf32>
    %7 = vector.extract_strided_slice %1 {offsets = [1, 0], sizes = [1, 256], strides = [1, 1]} : vector<9x256xf32> to vector<1x256xf32>
    %8 = vector.broadcast %7 : vector<1x256xf32> to vector<8x256xf32>
    %9 = arith.mulf %6, %8 : vector<8x256xf32>
    %c15_i32 = arith.constant 15 : i32
    %10 = tpu.dynamic_rotate %0 by %c15_i32 dim 1 : vector<8x256xf32>, i32 -> vector<8x256xf32>
    %11 = vector.extract_strided_slice %1 {offsets = [2, 0], sizes = [1, 256], strides = [1, 1]} : vector<9x256xf32> to vector<1x256xf32>
    %12 = vector.broadcast %11 : vector<1x256xf32> to vector<8x256xf32>
    %13 = arith.mulf %10, %12 : vector<8x256xf32>
    %c1_i32 = arith.constant 1 : i32
    %14 = tpu.dynamic_rotate %0 by %c1_i32 dim 1 : vector<8x256xf32>, i32 -> vector<8x256xf32>
    %15 = vector.extract_strided_slice %1 {offsets = [3, 0], sizes = [1, 256], strides = [1, 1]} : vector<9x256xf32> to vector<1x256xf32>
    %16 = vector.broadcast %15 : vector<1x256xf32> to vector<8x256xf32>
    %17 = arith.mulf %14, %16 : vector<8x256xf32>
    %c255_i32 = arith.constant 255 : i32
    %18 = tpu.dynamic_rotate %0 by %c255_i32 dim 1 : vector<8x256xf32>, i32 -> vector<8x256xf32>
    %19 = vector.extract_strided_slice %1 {offsets = [5, 0], sizes = [1, 256], strides = [1, 1]} : vector<9x256xf32> to vector<1x256xf32>
    %20 = vector.broadcast %19 : vector<1x256xf32> to vector<8x256xf32>
    %21 = arith.mulf %18, %20 : vector<8x256xf32>
    %c241_i32 = arith.constant 241 : i32
    %22 = tpu.dynamic_rotate %0 by %c241_i32 dim 1 : vector<8x256xf32>, i32 -> vector<8x256xf32>
    %23 = vector.extract_strided_slice %1 {offsets = [6, 0], sizes = [1, 256], strides = [1, 1]} : vector<9x256xf32> to vector<1x256xf32>
    %24 = vector.broadcast %23 : vector<1x256xf32> to vector<8x256xf32>
    %25 = arith.mulf %22, %24 : vector<8x256xf32>
    %c240_i32 = arith.constant 240 : i32
    %26 = tpu.dynamic_rotate %0 by %c240_i32 dim 1 : vector<8x256xf32>, i32 -> vector<8x256xf32>
    %27 = vector.extract_strided_slice %1 {offsets = [7, 0], sizes = [1, 256], strides = [1, 1]} : vector<9x256xf32> to vector<1x256xf32>
    %28 = vector.broadcast %27 : vector<1x256xf32> to vector<8x256xf32>
    %29 = arith.mulf %26, %28 : vector<8x256xf32>
    %c239_i32 = arith.constant 239 : i32
    %30 = tpu.dynamic_rotate %0 by %c239_i32 dim 1 : vector<8x256xf32>, i32 -> vector<8x256xf32>
    %31 = vector.extract_strided_slice %1 {offsets = [8, 0], sizes = [1, 256], strides = [1, 1]} : vector<9x256xf32> to vector<1x256xf32>
    %32 = vector.broadcast %31 : vector<1x256xf32> to vector<8x256xf32>
    %33 = arith.mulf %30, %32 : vector<8x256xf32>
    %cst = arith.constant 1.000000e+00 : f32
    %34 = vector.broadcast %cst : f32 to vector<8x256xf32>
    %35 = tpu.concatenate %5, %9, %13, %17, %0, %21, %25, %29, %33, %34 in 0 : vector<8x256xf32>, vector<8x256xf32>, vector<8x256xf32>, vector<8x256xf32>, vector<8x256xf32>, vector<8x256xf32>, vector<8x256xf32>, vector<8x256xf32>, vector<8x256xf32>, vector<8x256xf32> -> vector<80x256xf32>
    %c0_3 = arith.constant 0 : index
    %c0_4 = arith.constant 0 : index
    %36 = vector.load %arg2[%c0_3, %c0_4] : memref<8x80xf32, #tpu.memory_space<vmem>>, vector<8x80xf32>
    %cst_5 = arith.constant dense<0.000000e+00> : vector<8x256xf32>
    %37 = tpu.matmul %36, %35, %cst_5 {dimension_numbers = #tpu.dot_dimension_numbers<[1], [0], [0], [1], [0, 0, 1, 1], [], []>} : vector<8x80xf32>, vector<80x256xf32>, vector<8x256xf32> -> vector<8x256xf32>
    %c0_6 = arith.constant 0 : index
    %c0_7 = arith.constant 0 : index
    %38 = memref.load %arg4[%c0_6, %c0_7] : memref<1x1xf32, #tpu.memory_space<smem>>
    %39 = arith.subf %0, %37 : vector<8x256xf32>
    %40 = vector.broadcast %38 : f32 to vector<8x256xf32>
    %41 = arith.mulf %39, %40 : vector<8x256xf32>
    %c0_8 = arith.constant 0 : index
    %c0_9 = arith.constant 0 : index
    %42 = vector.load %arg5[%c0_8, %c0_9] : memref<8x256xf32, #tpu.memory_space<vmem>>, vector<8x256xf32>
    tpu.vector_store %arg5[%c0_8, %c0_9], %41 {strides = array<i32>} : memref<8x256xf32, #tpu.memory_space<vmem>>, vector<8x256xf32>,
    return
  }
  func.func @transform_0(%arg0: i32) -> (i32, i32) {
    %c0_i32 = arith.constant 0 : i32
    %c0_i32_0 = arith.constant 0 : i32
    return %arg0, %c0_i32 : i32, i32
  }
  func.func @transform_1(%arg0: i32) -> (i32, i32) {
    %c0_i32 = arith.constant 0 : i32
    %c0_i32_0 = arith.constant 0 : i32
    %c0_i32_1 = arith.constant 0 : i32
    return %c0_i32, %c0_i32_0 : i32, i32
  }
  func.func @transform_2(%arg0: i32) -> (i32, i32) {
    %c0_i32 = arith.constant 0 : i32
    %c0_i32_0 = arith.constant 0 : i32
    %c0_i32_1 = arith.constant 0 : i32
    return %c0_i32, %c0_i32_0 : i32, i32
  }
  func.func @transform_3(%arg0: i32) -> (i32, i32) {
    %c0_i32 = arith.constant 0 : i32
    %c0_i32_0 = arith.constant 0 : i32
    %c0_i32_1 = arith.constant 0 : i32
    return %c0_i32, %c0_i32_0 : i32, i32
  }
  func.func @transform_4(%arg0: i32) -> (i32, i32) {
    %c0_i32 = arith.constant 0 : i32
    %c0_i32_0 = arith.constant 0 : i32
    return %arg0, %c0_i32 : i32, i32
  }
}

</mosaic_0001>

<llo_original>
// kernel: tpu_custom_call.1
$region0: #{tpu_custom_call.1}
  #allocation0 [shape = 'u32[]', space=smem, size = 0x4, offset = 0x4, fixed_abs, tag = 'smem constant byte address 0x4 - core index']
  #allocation1 [shape = 'u32[144,128]{1,0:T(1,128)}', space=vmem, size = 0x12000, scoped, tag = 'internal scratch']
  #allocation2 [shape = 'f32[1,1]{1,0:T(1,128)S(6)}', space=smem, size = 0x200, scoped, tag = 'scoped memory for tpu_custom_call.1']
  %s0 = inlined_call_operand.hbm [shape: f32[8,256], index: 0, kind: input, shape index: {}]
  %s1 = inlined_call_operand.hbm [shape: f32[8,80], index: 1, kind: input, shape index: {}]
  %s2 = inlined_call_operand.hbm [shape: f32[9,256], index: 2, kind: input, shape index: {}]
  %s3 = inlined_call_operand.<no memory space> [shape: f32[1,1], index: 3, kind: input, shape index: {}]
  %s4 = inlined_call_operand.hbm [shape: f32[8,256], index: 4, kind: output, shape index: {}]
  %s5 = sld [smem:[#allocation0]]
  $region38: #{tpu_custom_call.1} parent=0
    _
  %s7 = ssub.s32 1, %s5
  %s8 = scalar_select 0, %s7, %s5
  %9 = sst [smem:[#allocation2]] %s3
  $region1: #{tpu_custom_call.1} parent=0
    #allocation3 [shape = 'u8[8192]{0}', space=vmem, size = 0x2000, scoped, tag = 'input window, operand 0, single buffered']
    #allocation4 [shape = 's32[1]{0}', space=sflag, size = 0x4, scoped, tag = 'scoped memory for tpu_custom_call.1']
    #allocation5 [shape = 's32[1]{0}', space=sflag, size = 0x4, scoped, tag = 'scoped memory for tpu_custom_call.1']
    #allocation6 [shape = 'u8[4096]{0}', space=vmem, size = 0x1000, scoped, tag = 'input window, operand 1, single buffered']
    #allocation7 [shape = 's32[1]{0}', space=sflag, size = 0x4, scoped, tag = 'scoped memory for tpu_custom_call.1']
    #allocation8 [shape = 'u8[16384]{0}', space=vmem, size = 0x4000, scoped, tag = 'input window, operand 2, single buffered']
    #allocation9 [shape = 'u8[8192]{0}', space=vmem, size = 0x2000, scoped, tag = 'output window, operand 0, single buffered']
    %10 = vsyncpa [#allocation4], 0
    %11 = vsyncpa [#allocation7], 0
    %12 = vsyncpa [#allocation5], 0
    // Predicated region
    $region2: #{tpu_custom_call.1} parent=1 // pred_check
      _
    $region3: #{tpu_custom_call.1} parent=1 // pred_check_branch
      %14 = sbr.rel (0) target = $region5
    $region4: #{tpu_custom_call.1} parent=1 // pred_region
      %s16 = ssub.s32 256, 256
      %17 = vsyncadd [#allocation4], %s16
      %s19 = sshll.u32 [#allocation3], 4
      %s20 = int_to_ptr.vmem [resolvable:$true] %s19
      %22 = dma.hbm_to_vmem [thread:$0]  %s0, 256, %s20, [#allocation4]
    $region5: #{tpu_custom_call.1} parent=1 // pred_fallthru
      _
    // Predicated region
    $region6: #{tpu_custom_call.1} parent=1 // pred_check
      _
    $region7: #{tpu_custom_call.1} parent=1 // pred_check_branch
      %24 = sbr.rel (0) target = $region9
    $region8: #{tpu_custom_call.1} parent=1 // pred_region
      %s26 = ssub.s32 128, 128
      %27 = vsyncadd [#allocation7], %s26
      %s29 = sshll.u32 [#allocation6], 4
      %s30 = int_to_ptr.vmem [resolvable:$true] %s29
      %32 = dma.hbm_to_vmem [thread:$0]  %s1, 128, %s30, [#allocation7]
    $region9: #{tpu_custom_call.1} parent=1 // pred_fallthru
      _
    // Predicated region
    $region10: #{tpu_custom_call.1} parent=1 // pred_check
      _
    $region11: #{tpu_custom_call.1} parent=1 // pred_check_branch
      %34 = sbr.rel (0) target = $region13
    $region12: #{tpu_custom_call.1} parent=1 // pred_region
      %s36 = ssub.s32 512, 512
      %37 = vsyncadd [#allocation7], %s36
      %s38 = sshll.u32 [#allocation8], 4
      %s39 = int_to_ptr.vmem [resolvable:$true] %s38
      %44 = dma.hbm_to_vmem [thread:$0]  %s2, 512, %s39, [#allocation7], 256, 256, 16
    $region13: #{tpu_custom_call.1} parent=1 // pred_fallthru
      _
    // Predicated region
    $region14: #{tpu_custom_call.1} parent=1 // pred_check
      _
    $region15: #{tpu_custom_call.1} parent=1 // pred_check_branch
      %46 = sbr.rel (0) target = $region17
    $region16: #{tpu_custom_call.1} parent=1 // pred_region
      _
    $region17: #{tpu_custom_call.1} parent=1 // pred_fallthru
      _
    // Predicated region
    $region18: #{tpu_custom_call.1} parent=1 // pred_check
      _
    $region19: #{tpu_custom_call.1} parent=1 // pred_check_branch
      %48 = sbr.rel (0) target = $region21
    $region20: #{tpu_custom_call.1} parent=1 // pred_region
      %49 = dma.done [#allocation4], 256
    $region21: #{tpu_custom_call.1} parent=1 // pred_fallthru
      _
    // Predicated region
    $region22: #{tpu_custom_call.1} parent=1 // pred_check
      _
    $region23: #{tpu_custom_call.1} parent=1 // pred_check_branch
      %51 = sbr.rel (0) target = $region25
    $region24: #{tpu_custom_call.1} parent=1 // pred_region
      %52 = dma.done [#allocation7], 128
    $region25: #{tpu_custom_call.1} parent=1 // pred_fallthru
      _
    // Predicated region
    $region26: #{tpu_custom_call.1} parent=1 // pred_check
      _
    $region27: #{tpu_custom_call.1} parent=1 // pred_check_branch
      %54 = sbr.rel (0) target = $region29
    $region28: #{tpu_custom_call.1} parent=1 // pred_region
      %55 = dma.done [#allocation7], 512
    $region29: #{tpu_custom_call.1} parent=1 // pred_fallthru
      _
    %v56 = vld [vmem:[#allocation3] sm:$0xff]
    %v57 = vld [vmem:[#allocation3 + $0x8] sm:$0xff]
    %v58 = vld [vmem:[#allocation8] sm:$0xff]
    %v59 = vld [vmem:[#allocation8 + $0x8] sm:$0xff]
    %v60 = vld [vmem:[#allocation8 + $0x10] sm:$0x1]
    %v61 = vld [vmem:[#allocation8 + $0x18] sm:$0x1]
    %62 = vrot.lane.b32.xlu0 %v56, 17
    %v63 = vpop.permute.xlu0 %62
    %64 = vrot.lane.b32.xlu0 %v57, 17
    %v65 = vpop.permute.xlu0 %64
    %v66 = vlaneseq
    %v67 = vand.u32 %v66, 127
    %vm68 = vcmp.lt.s32.totalorder %v67, 17
    %v69 = vsel %vm68, %v63, %v65
    %v70 = vsel %vm68, %v65, %v63
    %v71 = vlaneseq
    %v72 = vshrl.u32 %v71, 7
    %v73 = vsub.s32 0, %v72
    %v74 = vrot.slane %v58, %v73
    %v75 = vlaneseq
    %v76 = vshrl.u32 %v75, 7
    %v77 = vsub.s32 0, %v76
    %v78 = vrot.slane %v59, %v77
    %v79 = vmul.f32 %v70, %v74
    %v80 = vmul.f32 %v69, %v78
    %81 = vrot.lane.b32.xlu0 %v56, 16
    %v82 = vpop.permute.xlu0 %81
    %83 = vrot.lane.b32.xlu0 %v57, 16
    %v84 = vpop.permute.xlu0 %83
    %vm85 = vcmp.lt.s32.totalorder %v67, 16
    %v86 = vsel %vm85, %v82, %v84
    %v87 = vsel %vm85, %v84, %v82
    %v88 = vlaneseq
    %v89 = vshrl.u32 %v88, 7
    %v90 = vsub.s32 1, %v89
    %v91 = vrot.slane %v58, %v90
    %v92 = vlaneseq
    %v93 = vshrl.u32 %v92, 7
    %v94 = vsub.s32 1, %v93
    %v95 = vrot.slane %v59, %v94
    %v96 = vmul.f32 %v87, %v91
    %v97 = vmul.f32 %v86, %v95
    %98 = vrot.lane.b32.xlu0 %v56, 15
    %v99 = vpop.permute.xlu0 %98
    %100 = vrot.lane.b32.xlu0 %v57, 15
    %v101 = vpop.permute.xlu0 %100
    %vm102 = vcmp.lt.s32.totalorder %v67, 15
    %v103 = vsel %vm102, %v99, %v101
    %v104 = vsel %vm102, %v101, %v99
    %v105 = vlaneseq
    %v106 = vshrl.u32 %v105, 7
    %v107 = vsub.s32 2, %v106
    %v108 = vrot.slane %v58, %v107
    %v109 = vlaneseq
    %v110 = vshrl.u32 %v109, 7
    %v111 = vsub.s32 2, %v110
    %v112 = vrot.slane %v59, %v111
    %v113 = vmul.f32 %v104, %v108
    %v114 = vmul.f32 %v103, %v112
    %115 = vrot.lane.b32.xlu0 %v56, 1
    %v116 = vpop.permute.xlu0 %115
    %117 = vrot.lane.b32.xlu0 %v57, 1
    %v118 = vpop.permute.xlu0 %117
    %vm119 = vcmp.lt.s32.totalorder %v67, 1
    %v120 = vsel %vm119, %v116, %v118
    %v121 = vsel %vm119, %v118, %v116
    %v122 = vlaneseq
    %v123 = vshrl.u32 %v122, 7
    %v124 = vsub.s32 3, %v123
    %v125 = vrot.slane %v58, %v124
    %v126 = vlaneseq
    %v127 = vshrl.u32 %v126, 7
    %v128 = vsub.s32 3, %v127
    %v129 = vrot.slane %v59, %v128
    %v130 = vmul.f32 %v121, %v125
    %v131 = vmul.f32 %v120, %v129
    %132 = vrot.lane.b32.xlu0 %v56, 127
    %v133 = vpop.permute.xlu0 %132
    %134 = vrot.lane.b32.xlu0 %v57, 127
    %v135 = vpop.permute.xlu0 %134
    %vm136 = vcmp.lt.s32.totalorder %v67, 127
    %v137 = vsel %vm136, %v133, %v135
    %v138 = vsel %vm136, %v135, %v133
    %v139 = vlaneseq
    %v140 = vshrl.u32 %v139, 7
    %v141 = vsub.s32 5, %v140
    %v142 = vrot.slane %v58, %v141
    %v143 = vlaneseq
    %v144 = vshrl.u32 %v143, 7
    %v145 = vsub.s32 5, %v144
    %v146 = vrot.slane %v59, %v145
    %v147 = vmul.f32 %v137, %v142
    %v148 = vmul.f32 %v138, %v146
    %149 = vrot.lane.b32.xlu0 %v56, 113
    %v150 = vpop.permute.xlu0 %149
    %151 = vrot.lane.b32.xlu0 %v57, 113
    %v152 = vpop.permute.xlu0 %151
    %vm153 = vcmp.lt.s32.totalorder %v67, 113
    %v154 = vsel %vm153, %v150, %v152
    %v155 = vsel %vm153, %v152, %v150
    %v156 = vlaneseq
    %v157 = vshrl.u32 %v156, 7
    %v158 = vsub.s32 6, %v157
    %v159 = vrot.slane %v58, %v158
    %v160 = vlaneseq
    %v161 = vshrl.u32 %v160, 7
    %v162 = vsub.s32 6, %v161
    %v163 = vrot.slane %v59, %v162
    %v164 = vmul.f32 %v154, %v159
    %v165 = vmul.f32 %v155, %v163
    %166 = vrot.lane.b32.xlu0 %v56, 112
    %v167 = vpop.permute.xlu0 %166
    %168 = vrot.lane.b32.xlu0 %v57, 112
    %v169 = vpop.permute.xlu0 %168
    %vm170 = vcmp.lt.s32.totalorder %v67, 112
    %v171 = vsel %vm170, %v167, %v169
    %v172 = vsel %vm170, %v169, %v167
    %v173 = vlaneseq
    %v174 = vshrl.u32 %v173, 7
    %v175 = vsub.s32 7, %v174
    %v176 = vrot.slane %v58, %v175
    %v177 = vlaneseq
    %v178 = vshrl.u32 %v177, 7
    %v179 = vsub.s32 7, %v178
    %v180 = vrot.slane %v59, %v179
    %v181 = vmul.f32 %v171, %v176
    %v182 = vmul.f32 %v172, %v180
    %183 = vrot.lane.b32.xlu0 %v56, 111
    %v184 = vpop.permute.xlu0 %183
    %185 = vrot.lane.b32.xlu0 %v57, 111
    %v186 = vpop.permute.xlu0 %185
    %vm187 = vcmp.lt.s32.totalorder %v67, 111
    %v188 = vsel %vm187, %v184, %v186
    %v189 = vsel %vm187, %v186, %v184
    %v190 = vlaneseq
    %v191 = vshrl.u32 %v190, 7
    %v192 = vsub.s32 0, %v191
    %v193 = vrot.slane %v60, %v192
    %v194 = vlaneseq
    %v195 = vshrl.u32 %v194, 7
    %v196 = vsub.s32 0, %v195
    %v197 = vrot.slane %v61, %v196
    %v198 = vmul.f32 %v188, %v193
    %v199 = vmul.f32 %v189, %v197
    %v200 = vld [vmem:[#allocation6] sm:$0xff]
    %vm201 = vcmask 654336
    %v203 = vsel %vm201, %v200, 0
    %205 = vmatprep.subr.mxu0 %v80
    %206 = vmatpush1.msra.mxu0 %v79
    %207 = vmatprep.subr.mxu0 %v97
    %208 = vmatpush1.msra.mxu0 %v96
    %209 = vmatprep.subr.mxu0 %v114
    %210 = vmatpush1.msra.mxu0 %v113
    %211 = vmatprep.subr.mxu0 %v131
    %212 = vmatpush1.msra.mxu0 %v130
    %213 = vmatprep.subr.mxu0 %v57
    %214 = vmatpush1.msra.mxu0 %v56
    %215 = vmatprep.subr.mxu0 %v148
    %216 = vmatpush1.msra.mxu0 %v147
    %217 = vmatprep.subr.mxu0 %v165
    %218 = vmatpush1.msra.mxu0 %v164
    %219 = vmatprep.subr.mxu0 %v182
    %220 = vmatpush1.msra.mxu0 %v181
    %221 = vmatprep.subr.mxu0 %v199
    %222 = vmatpush1.msra.mxu0 %v198
    %223 = vmatprep.subr.mxu0 1.0
    %224 = vmatpush1.msra.mxu0 1.0
    %225 = vmatprep.subr.mxu0 0.0
    %226 = vmatpush1.msra.mxu0 0.0
    %227 = vmatprep.subr.mxu0 0.0
    %228 = vmatpush1.msra.mxu0 0.0
    %229 = vmatprep.subr.mxu0 0.0
    %230 = vmatpush1.msra.mxu0 0.0
    %231 = vmatprep.subr.mxu0 0.0
    %232 = vmatpush1.msra.mxu0 0.0
    %233 = vmatprep.subr.mxu0 0.0
    %234 = vmatpush1.msra.mxu0 0.0
    %235 = vmatprep.subr.mxu0 0.0
    %236 = vmatpush1.msra.mxu0 0.0
    %237 = vmatprep.subr.mxu0 0.0
    %238 = vmatpush1.msra.mxu0 0.0
    %239 = vmatprep.subr.mxu0 0.0
    %240 = vmatpush1.msra.mxu0 0.0
    %241 = vmatprep.subr.mxu0 0.0
    %242 = vmatpush1.msra.mxu0 0.0
    %243 = vmatprep.subr.mxu0 0.0
    %244 = vmatpush1.msra.mxu0 0.0
    %245 = vmatprep.subr.mxu0 0.0
    %246 = vmatpush1.msra.mxu0 0.0
    %247 = vmatprep.subr.mxu0 0.0
    %248 = vmatpush1.msra.mxu0 0.0
    %249 = vmatprep.subr.mxu0 0.0
    %250 = vmatpush1.msra.mxu0 0.0
    %251 = vmatprep.subr.mxu0 0.0
    %252 = vmatpush1.msra.mxu0 0.0
    %253 = vmatprep.subr.mxu0 0.0
    %254 = vmatpush1.msra.mxu0 0.0
    %255 = vmatprep.subr.mxu0 0.0
    %256 = vmatpush1.msra.mxu0 0.0
    %257 = vmatprep.subr.mxu0 0.0
    %258 = vmatpush1.msra.mxu0 0.0
    %259 = vmatprep.subr.mxu0 0.0
    %260 = vmatpush1.msra.mxu0 0.0
    %261 = vmatprep.subr.mxu0 0.0
    %262 = vmatpush1.msra.mxu0 0.0
    %263 = vmatprep.subr.mxu0 0.0
    %264 = vmatpush1.msra.mxu0 0.0
    %265 = vmatprep.subr.mxu0 0.0
    %266 = vmatpush1.msra.mxu0 0.0
    %267 = vmatprep.subr.mxu0 0.0
    %268 = vmatpush1.msra.mxu0 0.0
    %269 = vmatprep.mubr.f32.mxu0 0.0
    %270 = vmatmul.mubr.f32.gmra.mrb[0].mxu0 %v203
    %v271 = vpop.f32.mrb[0].mxu0
    %v272 = vadd.f32 0.0, %v271
    %v273 = vpop.f32.mrb[0].mxu0
    %v274 = vadd.f32 0.0, %v273
    %275 = vdwg.mxu0
    %s276 = sld [smem:[#allocation2]]
    %v277 = vsub.f32 %v56, %v272
    %v278 = vsub.f32 %v57, %v274
    %v279 = vstv %s276
    %v280 = vmul.f32 %v277, %v279
    %v281 = vmul.f32 %v278, %v279
    %282 = vst [vmem:[#allocation9] sm:$0xff] %v280
    %283 = vst [vmem:[#allocation9 + $0x8] sm:$0xff] %v281
    // Predicated region
    $region30: #{tpu_custom_call.1} parent=1 // pred_check
      _
    $region31: #{tpu_custom_call.1} parent=1 // pred_check_branch
      %285 = sbr.rel (0) target = $region33
    $region32: #{tpu_custom_call.1} parent=1 // pred_region
      %s287 = ssub.s32 256, 256
      %288 = vsyncadd [#allocation5], %s287
      %s290 = sshll.u32 [#allocation9], 4
      %s291 = int_to_ptr.vmem [resolvable:$true] %s290
      %293 = dma.vmem_to_hbm [thread:$0]  %s291, 256, %s4, [#allocation5]
    $region33: #{tpu_custom_call.1} parent=1 // pred_fallthru
      _
    // Predicated region
    $region34: #{tpu_custom_call.1} parent=1 // pred_check
      _
    $region35: #{tpu_custom_call.1} parent=1 // pred_check_branch
      %295 = sbr.rel (0) target = $region37
    $region36: #{tpu_custom_call.1} parent=1 // pred_region
      %296 = dma.done [#allocation5], 256
    $region37: #{tpu_custom_call.1} parent=1 // pred_fallthru
      _
    %297 = vsyncpa [#allocation4], 1
    %298 = vsyncpa [#allocation7], 1
    %299 = vsyncpa [#allocation5], 1

</llo_original>
